<compile_context>
chip_gen: v7x
topology: tpu7x:2x2x1
jax: 0.10.0
libtpu: 0.0.40
codegen_flags: <defaults>
</compile_context>

<pallas_src>
import functools

import jax
import jax.numpy as jnp
from jax.experimental import pallas as pl
from jax.experimental.pallas import tpu as pltpu

BETA = 1.0 / 9.0
DET_W = 1.0
REG_W = 20.0

_LANES = 128
_MAX_TILE_ROWS = 2048      # det/pres tile (2048,128) f32 = 1 MiB each; loc/reg tiles are 2x rows.
_PALLAS_MIN_N = 65536      # below this, the fused pure-JAX path wins.


def _num_tensorcores():
    """Best-effort TensorCores-per-device count (for the megacore grid split). Defaults to 1."""
    try:
        kind = jax.devices()[0].device_kind.lower()
    except Exception:
        return 1
    # v4 (megacore) and v7x expose 2 TensorCores per device; v5e / v6e have 1.
    return 2 if ("v4" in kind or "v7" in kind) else 1


def _sublane_granule(dtype):
    # f32 -> 8, bf16/f16 -> 16, int8/fp8 -> 32 (min sublane tile per dtype).
    return max(8, 32 // jnp.dtype(dtype).itemsize)


def _bce_terms(p, y):
    # torch.nn.BCELoss clamps log at -100; the clamp must fire BEFORE the multiply so that
    # y == 0 with p == 0 (or garbage) contributes 0, not NaN.
    log_p = jnp.maximum(jnp.log(p), -100.0)
    log_1mp = jnp.maximum(jnp.log(1.0 - p), -100.0)
    return -(y * log_p + (1.0 - y) * log_1mp)


def _smooth_l1_terms(a, b, beta):
    # Constants pre-folded into multiplies (no per-element divide on the EUP).
    d = jnp.abs(a - b)
    return jnp.where(d < beta, d * d * (0.5 / beta), d - 0.5 * beta)


def _fold_rows(x):
    """(R,128) -> (8,128) partial sums using only major-dim (VALU) adds; R is a multiple of 8."""
    r = x.shape[0]
    return x.reshape(r // 8, 8, _LANES).sum(axis=0)


def _loss_pollo_kernel(det_ref, pres_ref, loc_ref, reg_ref, out_ref,
                       *, beta, valid_rows, need_mask):
    """out_ref: (1, 3, 8, 128) VMEM block per core: [bce, smooth_l1, presence] accumulators."""
    i = pl.program_id(1)

    @pl.when(i == 0)
    def _():
        out_ref[...] = jnp.zeros_like(out_ref)

    p = det_ref[...].astype(jnp.float32)
    y = pres_ref[...].astype(jnp.float32)
    bce = _bce_terms(p, y)
    sl1 = _smooth_l1_terms(loc_ref[...].astype(jnp.float32),
                           reg_ref[...].astype(jnp.float32), beta)

    if need_mask:
        # Logical (unclamped) tile index; the index_map clamps the DMA in-bounds, so rows past
        # `valid_rows` (partial edge tile or a duplicated clamped tile) must contribute zero.
        tile_rows = det_ref.shape[0]
        t = pl.program_id(0) * pl.num_programs(1) + i
        lim = valid_rows - t * tile_rows
        row_d = jax.lax.broadcasted_iota(jnp.int32, bce.shape, 0)
        row_l = jax.lax.broadcasted_iota(jnp.int32, sl1.shape, 0)
        mask_d = row_d < lim
        bce = jnp.where(mask_d, bce, 0.0)
        y = jnp.where(mask_d, y, 0.0)
        sl1 = jnp.where(row_l < 2 * lim, sl1, 0.0)

    # Sublane-direction accumulation only; no cross-lane reduce inside the grid loop.
    out_ref[0, 0] += _fold_rows(bce)
    out_ref[0, 1] += _fold_rows(sl1)
    out_ref[0, 2] += _fold_rows(y)


def _loss_from_sums(bce_sum, sl1_sum, pres_sum, n, det_w, reg_w):
    det_loss = bce_sum / n
    # Matches the PyTorch module: global SmoothL1 mean rescaled by the presence-sum factor.
    loc_loss = (sl1_sum / (2.0 * n)) * pres_sum / (pres_sum + 1e-6)
    total_loss = det_w * det_loss + reg_w * loc_loss
    return {"det_loss": det_loss, "loc_loss": loc_loss, "total_loss": total_loss}


def _loss_pollo_jax(det_prob_pred, loc_pred, presence, loc_reg, beta, det_w, reg_w):
    """Pure-JAX path (small n / non-tileable shapes); identical math to the kernel path."""
    bce_sum = jnp.sum(_bce_terms(det_prob_pred.astype(jnp.float32),
                                 presence.astype(jnp.float32)))
    sl1_sum = jnp.sum(_smooth_l1_terms(loc_pred.astype(jnp.float32),
                                       loc_reg.astype(jnp.float32), beta))
    pres_sum = jnp.sum(presence.astype(jnp.float32))
    return _loss_from_sums(bce_sum, sl1_sum, pres_sum, det_prob_pred.shape[0], det_w, reg_w)


def loss_pollo(det_prob_pred, loc_pred, batched_obj_presence, batched_loc_reg,
               *, beta=BETA, det_w=DET_W, reg_w=REG_W, force_pallas=False):
    """det_prob_pred: (n,), loc_pred: (n,2), batched_obj_presence: (n,), batched_loc_reg: (n,2)."""
    n = det_prob_pred.shape[0]
    rows = n // _LANES
    granule = max(_sublane_granule(a.dtype) for a in
                  (det_prob_pred, loc_pred, batched_obj_presence, batched_loc_reg))

    use_pallas = (force_pallas or n >= _PALLAS_MIN_N) and rows >= granule
    if not use_pallas:
        return _loss_pollo_jax(det_prob_pred, loc_pred, batched_obj_presence,
                               batched_loc_reg, beta, det_w, reg_w)

    n_main = rows * _LANES
    tail = n - n_main

    # Lane-dense (rows,128) slabs.  Free reshape (no pad, no copy) when n % 128 == 0; otherwise
    # one prefix materialization (still cheaper than padding + rewriting all four full arrays).
    if tail:
        det2d = det_prob_pred[:n_main].reshape(rows, _LANES)
        pres2d = batched_obj_presence[:n_main].reshape(rows, _LANES)
        loc2d = loc_pred[:n_main].reshape(2 * rows, _LANES)
        reg2d = batched_loc_reg[:n_main].reshape(2 * rows, _LANES)
    else:
        det2d = det_prob_pred.reshape(rows, _LANES)
        pres2d = batched_obj_presence.reshape(rows, _LANES)
        loc2d = loc_pred.reshape(2 * rows, _LANES)
        reg2d = batched_loc_reg.reshape(2 * rows, _LANES)

    # tile_rows is always a granule multiple and <= rows, so every BlockSpec is legal; a partial
    # last tile (rows % tile_rows != 0) is handled by the in-kernel row mask, never by padding.
    tile_rows = min(_MAX_TILE_ROWS, (rows // granule) * granule)
    total_tiles = pl.cdiv(rows, tile_rows)
    num_cores = max(1, min(_num_tensorcores(), total_tiles))
    tiles_per_core = pl.cdiv(total_tiles, num_cores)
    need_mask = (tiles_per_core * num_cores * tile_rows != rows)

    def in_map(c, i):
        # Clamp so the DMA never indexes past the last real tile; the kernel masks the logical
        # (unclamped) tile position so a duplicated clamped tile contributes exactly zero.
        return (jnp.minimum(c * tiles_per_core + i, total_tiles - 1), 0)

    step_bytes = ((det2d.dtype.itemsize + pres2d.dtype.itemsize) * tile_rows * _LANES
                  + (loc2d.dtype.itemsize + reg2d.dtype.itemsize) * 2 * tile_rows * _LANES)
    vmem_limit = int(min(64 << 20, 2 * step_bytes + (8 << 20)))   # double-buffered tiles + headroom

    in_bytes = sum(int(a.size) * a.dtype.itemsize for a in (det2d, pres2d, loc2d, reg2d))
    out_bytes = num_cores * 3 * 8 * _LANES * 4
    cost = pl.CostEstimate(flops=22 * n, transcendentals=2 * n,
                           bytes_accessed=in_bytes + out_bytes)

    kernel = functools.partial(_loss_pollo_kernel, beta=float(beta),
                               valid_rows=rows, need_mask=need_mask)

    partials = pl.pallas_call(
        kernel,
        out_shape=jax.ShapeDtypeStruct((num_cores, 3, 8, _LANES), jnp.float32),
        grid_spec=pltpu.PrefetchScalarGridSpec(
            num_scalar_prefetch=0,
            grid=(num_cores, tiles_per_core),
            in_specs=[
                pl.BlockSpec((tile_rows, _LANES), in_map),
                pl.BlockSpec((tile_rows, _LANES), in_map),
                pl.BlockSpec((2 * tile_rows, _LANES), in_map),
                pl.BlockSpec((2 * tile_rows, _LANES), in_map),
            ],
            out_specs=pl.BlockSpec((1, 3, 8, _LANES), lambda c, i: (c, 0, 0, 0)),
        ),
        compiler_params=pltpu.CompilerParams(
            dimension_semantics=("parallel", "arbitrary"),
            vmem_limit_bytes=vmem_limit),
        cost_estimate=cost,
    )(det2d, pres2d, loc2d, reg2d)

    # Combine per-core / per-lane partials (tiny: (num_cores, 3, 8, 128)).
    sums = jnp.sum(partials, axis=(0, 2, 3))
    bce_sum, sl1_sum, pres_sum = sums[0], sums[1], sums[2]

    if tail:
        # < 128 anchors: fold the tail in with a handful of fused XLA ops.
        det_t = det_prob_pred[n_main:].astype(jnp.float32)
        pres_t = batched_obj_presence[n_main:].astype(jnp.float32)
        loc_t = loc_pred[n_main:].astype(jnp.float32)
        reg_t = batched_loc_reg[n_main:].astype(jnp.float32)
        bce_sum = bce_sum + jnp.sum(_bce_terms(det_t, pres_t))
        sl1_sum = sl1_sum + jnp.sum(_smooth_l1_terms(loc_t, reg_t, beta))
        pres_sum = pres_sum + jnp.sum(pres_t)

    return _loss_from_sums(bce_sum, sl1_sum, pres_sum, n, det_w, reg_w)


if __name__ == "__main__":
    key = jax.random.PRNGKey(0)

    def make_inputs(n, k):
        k1, k2, k3, k4 = jax.random.split(k, 4)
        det = jax.nn.sigmoid(jax.random.normal(k1, (n,), jnp.float32))
        loc = jax.random.normal(k2, (n, 2), jnp.float32)
        pres = (jax.random.uniform(k3, (n,)) > 0.5).astype(jnp.float32)
        reg = jax.random.normal(k4, (n, 2), jnp.float32)
        return det, loc, pres, reg

    cases = [
        (1000, False),     # small-n fast path (pure JAX)
        (4096, True),      # kernel: single full tile, 128-aligned, no masking
        (5000, True),      # kernel: two tiles (partial edge tile masked) + <128-anchor JAX tail
        (266000, True),    # kernel: multi 2048-row tiles, partial edge tile masked, JAX tail
    ]
    for n, force in cases:
        key, sub = jax.random.split(key)
        det, loc, pres, reg = make_inputs(n, sub)
        out = loss_pollo(det, loc, pres, reg, force_pallas=force)
        jax.block_until_ready(out)
        ref = _loss_pollo_jax(det, loc, pres, reg, BETA, DET_W, REG_W)
        for name in ("det_loss", "loc_loss", "total_loss"):
            assert jnp.allclose(out[name], ref[name], rtol=2e-4, atol=2e-5), \
                (n, name, out[name], ref[name])

    print("KERNEL_OK")
</pallas_src>

<mosaic_0001>
module attributes {stable_mosaic.version = 11 : i64} {
  func.func @_loss_pollo_kernel(%arg0: i32, %arg1: i32, %arg2: memref<32x128xf32, #tpu.memory_space<vmem>>, %arg3: memref<32x128xf32, #tpu.memory_space<vmem>>, %arg4: memref<64x128xf32, #tpu.memory_space<vmem>>, %arg5: memref<64x128xf32, #tpu.memory_space<vmem>>, %arg6: memref<1x3x8x128xf32, #tpu.memory_space<vmem>>) attributes {dimension_semantics = [#tpu.dimension_semantics<parallel>, #tpu.dimension_semantics<arbitrary>], iteration_bounds = array<i64: 1, 1>, scalar_prefetch = 0 : i64, scratch_operands = 0 : i64, tpu.core_type = #tpu.core_type<tc>, window_params = [{transform_indices = @transform_0, window_bounds = array<i64: 32, 128>}, {transform_indices = @transform_1, window_bounds = array<i64: 32, 128>}, {transform_indices = @transform_2, window_bounds = array<i64: 64, 128>}, {transform_indices = @transform_3, window_bounds = array<i64: 64, 128>}, {transform_indices = @transform_4, window_bounds = array<i64: 1, 3, 8, 128>}]} {
    %c0_i32 = arith.constant 0 : i32
    %0 = arith.cmpi eq, %arg1, %c0_i32 : i32
    %1 = arith.extui %0 : i1 to i32
    %c0_i32_0 = arith.constant 0 : i32
    %2 = arith.cmpi ne, %1, %c0_i32_0 : i32
    scf.if %2 {
      %cst_40 = arith.constant 0.000000e+00 : f32
      %56 = vector.broadcast %cst_40 : f32 to vector<1x3x8x128xf32>
      %c0_41 = arith.constant 0 : index
      %c0_42 = arith.constant 0 : index
      %c0_43 = arith.constant 0 : index
      %c0_44 = arith.constant 0 : index
      %57 = vector.load %arg6[%c0_41, %c0_42, %c0_43, %c0_44] : memref<1x3x8x128xf32, #tpu.memory_space<vmem>>, vector<1x3x8x128xf32>
      tpu.vector_store %arg6[%c0_41, %c0_42, %c0_43, %c0_44], %56 {strides = array<i32>} : memref<1x3x8x128xf32, #tpu.memory_space<vmem>>, vector<1x3x8x128xf32>,
    } else {
    }
    %c0 = arith.constant 0 : index
    %c0_1 = arith.constant 0 : index
    %3 = vector.load %arg2[%c0, %c0_1] : memref<32x128xf32, #tpu.memory_space<vmem>>, vector<32x128xf32>
    %c0_2 = arith.constant 0 : index
    %c0_3 = arith.constant 0 : index
    %4 = vector.load %arg3[%c0_2, %c0_3] : memref<32x128xf32, #tpu.memory_space<vmem>>, vector<32x128xf32>
    %5 = math.log %3 : vector<32x128xf32>
    %cst = arith.constant -1.000000e+02 : f32
    %6 = vector.broadcast %cst : f32 to vector<32x128xf32>
    %7 = arith.maximumf %5, %6 : vector<32x128xf32>
    %cst_4 = arith.constant 1.000000e+00 : f32
    %8 = vector.broadcast %cst_4 : f32 to vector<32x128xf32>
    %9 = arith.subf %8, %3 : vector<32x128xf32>
    %10 = math.log %9 : vector<32x128xf32>
    %cst_5 = arith.constant -1.000000e+02 : f32
    %11 = vector.broadcast %cst_5 : f32 to vector<32x128xf32>
    %12 = arith.maximumf %10, %11 : vector<32x128xf32>
    %13 = arith.mulf %4, %7 : vector<32x128xf32>
    %cst_6 = arith.constant 1.000000e+00 : f32
    %14 = vector.broadcast %cst_6 : f32 to vector<32x128xf32>
    %15 = arith.subf %14, %4 : vector<32x128xf32>
    %16 = arith.mulf %15, %12 : vector<32x128xf32>
    %17 = arith.addf %13, %16 : vector<32x128xf32>
    %cst_7 = arith.constant 0.000000e+00 : f32
    %18 = vector.broadcast %cst_7 : f32 to vector<32x128xf32>
    %19 = arith.subf %18, %17 : vector<32x128xf32>
    %c0_8 = arith.constant 0 : index
    %c0_9 = arith.constant 0 : index
    %20 = vector.load %arg4[%c0_8, %c0_9] : memref<64x128xf32, #tpu.memory_space<vmem>>, vector<64x128xf32>
    %c0_10 = arith.constant 0 : index
    %c0_11 = arith.constant 0 : index
    %21 = vector.load %arg5[%c0_10, %c0_11] : memref<64x128xf32, #tpu.memory_space<vmem>>, vector<64x128xf32>
    %22 = arith.subf %20, %21 : vector<64x128xf32>
    %23 = math.absf %22 : vector<64x128xf32>
    %cst_12 = arith.constant 0.111111112 : f32
    %24 = vector.broadcast %cst_12 : f32 to vector<64x128xf32>
    %25 = arith.cmpf olt, %23, %24 : vector<64x128xf32>
    %26 = arith.mulf %23, %23 : vector<64x128xf32>
    %cst_13 = arith.constant 4.500000e+00 : f32
    %27 = vector.broadcast %cst_13 : f32 to vector<64x128xf32>
    %28 = arith.mulf %26, %27 : vector<64x128xf32>
    %cst_14 = arith.constant 0.055555556 : f32
    %29 = vector.broadcast %cst_14 : f32 to vector<64x128xf32>
    %30 = arith.subf %23, %29 : vector<64x128xf32>
    %31 = arith.select %25, %28, %30 : vector<64x128xi1>, vector<64x128xf32>
    %c0_15 = arith.constant 0 : index
    %c0_16 = arith.constant 0 : index
    %c0_17 = arith.constant 0 : index
    %c0_18 = arith.constant 0 : index
    %32 = vector.load %arg6[%c0_15, %c0_16, %c0_17, %c0_18] : memref<1x3x8x128xf32, #tpu.memory_space<vmem>>, vector<1x1x8x128xf32>
    %33 = vector.shape_cast %32 : vector<1x1x8x128xf32> to vector<8x128xf32>
    %34 = vector.shape_cast %19 : vector<32x128xf32> to vector<4x8x128xf32>
    %cst_19 = arith.constant dense<0.000000e+00> : vector<8x128xf32>
    %35 = vector.multi_reduction <add>, %34, %cst_19 [0] : vector<4x8x128xf32> to vector<8x128xf32>
    %36 = arith.addf %33, %35 : vector<8x128xf32>
    %c0_20 = arith.constant 0 : index
    %c0_21 = arith.constant 0 : index
    %c0_22 = arith.constant 0 : index
    %c0_23 = arith.constant 0 : index
    %37 = vector.load %arg6[%c0_20, %c0_21, %c0_22, %c0_23] : memref<1x3x8x128xf32, #tpu.memory_space<vmem>>, vector<1x1x8x128xf32>
    %38 = vector.shape_cast %37 : vector<1x1x8x128xf32> to vector<8x128xf32>
    %39 = vector.shape_cast %36 : vector<8x128xf32> to vector<1x1x8x128xf32>
    tpu.vector_store %arg6[%c0_20, %c0_21, %c0_22, %c0_23], %39 {strides = array<i32>} : memref<1x3x8x128xf32, #tpu.memory_space<vmem>>, vector<1x1x8x128xf32>,
    %c0_24 = arith.constant 0 : index
    %c1 = arith.constant 1 : index
    %c0_25 = arith.constant 0 : index
    %c0_26 = arith.constant 0 : index
    %40 = vector.load %arg6[%c0_24, %c1, %c0_25, %c0_26] : memref<1x3x8x128xf32, #tpu.memory_space<vmem>>, vector<1x1x8x128xf32>
    %41 = vector.shape_cast %40 : vector<1x1x8x128xf32> to vector<8x128xf32>
    %42 = vector.shape_cast %31 : vector<64x128xf32> to vector<8x8x128xf32>
    %cst_27 = arith.constant dense<0.000000e+00> : vector<8x128xf32>
    %43 = vector.multi_reduction <add>, %42, %cst_27 [0] : vector<8x8x128xf32> to vector<8x128xf32>
    %44 = arith.addf %41, %43 : vector<8x128xf32>
    %c0_28 = arith.constant 0 : index
    %c1_29 = arith.constant 1 : index
    %c0_30 = arith.constant 0 : index
    %c0_31 = arith.constant 0 : index
    %45 = vector.load %arg6[%c0_28, %c1_29, %c0_30, %c0_31] : memref<1x3x8x128xf32, #tpu.memory_space<vmem>>, vector<1x1x8x128xf32>
    %46 = vector.shape_cast %45 : vector<1x1x8x128xf32> to vector<8x128xf32>
    %47 = vector.shape_cast %44 : vector<8x128xf32> to vector<1x1x8x128xf32>
    tpu.vector_store %arg6[%c0_28, %c1_29, %c0_30, %c0_31], %47 {strides = array<i32>} : memref<1x3x8x128xf32, #tpu.memory_space<vmem>>, vector<1x1x8x128xf32>,
    %c0_32 = arith.constant 0 : index
    %c2 = arith.constant 2 : index
    %c0_33 = arith.constant 0 : index
    %c0_34 = arith.constant 0 : index
    %48 = vector.load %arg6[%c0_32, %c2, %c0_33, %c0_34] : memref<1x3x8x128xf32, #tpu.memory_space<vmem>>, vector<1x1x8x128xf32>
    %49 = vector.shape_cast %48 : vector<1x1x8x128xf32> to vector<8x128xf32>
    %50 = vector.shape_cast %4 : vector<32x128xf32> to vector<4x8x128xf32>
    %cst_35 = arith.constant dense<0.000000e+00> : vector<8x128xf32>
    %51 = vector.multi_reduction <add>, %50, %cst_35 [0] : vector<4x8x128xf32> to vector<8x128xf32>
    %52 = arith.addf %49, %51 : vector<8x128xf32>
    %c0_36 = arith.constant 0 : index
    %c2_37 = arith.constant 2 : index
    %c0_38 = arith.constant 0 : index
    %c0_39 = arith.constant 0 : index
    %53 = vector.load %arg6[%c0_36, %c2_37, %c0_38, %c0_39] : memref<1x3x8x128xf32, #tpu.memory_space<vmem>>, vector<1x1x8x128xf32>
    %54 = vector.shape_cast %53 : vector<1x1x8x128xf32> to vector<8x128xf32>
    %55 = vector.shape_cast %52 : vector<8x128xf32> to vector<1x1x8x128xf32>
    tpu.vector_store %arg6[%c0_36, %c2_37, %c0_38, %c0_39], %55 {strides = array<i32>} : memref<1x3x8x128xf32, #tpu.memory_space<vmem>>, vector<1x1x8x128xf32>,
    return
  }
  func.func @transform_0(%arg0: i32, %arg1: i32) -> (i32, i32) {
    %c1_i32 = arith.constant 1 : i32
    %0 = arith.muli %arg0, %c1_i32 : i32
    %1 = arith.addi %0, %arg1 : i32
    %c0_i32 = arith.constant 0 : i32
    %2 = arith.minsi %1, %c0_i32 : i32
    %c0_i32_0 = arith.constant 0 : i32
    %c0_i32_1 = arith.constant 0 : i32
    return %2, %c0_i32_0 : i32, i32
  }
  func.func @transform_1(%arg0: i32, %arg1: i32) -> (i32, i32) {
    %c1_i32 = arith.constant 1 : i32
    %0 = arith.muli %arg0, %c1_i32 : i32
    %1 = arith.addi %0, %arg1 : i32
    %c0_i32 = arith.constant 0 : i32
    %2 = arith.minsi %1, %c0_i32 : i32
    %c0_i32_0 = arith.constant 0 : i32
    %c0_i32_1 = arith.constant 0 : i32
    return %2, %c0_i32_0 : i32, i32
  }
  func.func @transform_2(%arg0: i32, %arg1: i32) -> (i32, i32) {
    %c1_i32 = arith.constant 1 : i32
    %0 = arith.muli %arg0, %c1_i32 : i32
    %1 = arith.addi %0, %arg1 : i32
    %c0_i32 = arith.constant 0 : i32
    %2 = arith.minsi %1, %c0_i32 : i32
    %c0_i32_0 = arith.constant 0 : i32
    %c0_i32_1 = arith.constant 0 : i32
    return %2, %c0_i32_0 : i32, i32
  }
  func.func @transform_3(%arg0: i32, %arg1: i32) -> (i32, i32) {
    %c1_i32 = arith.constant 1 : i32
    %0 = arith.muli %arg0, %c1_i32 : i32
    %1 = arith.addi %0, %arg1 : i32
    %c0_i32 = arith.constant 0 : i32
    %2 = arith.minsi %1, %c0_i32 : i32
    %c0_i32_0 = arith.constant 0 : i32
    %c0_i32_1 = arith.constant 0 : i32
    return %2, %c0_i32_0 : i32, i32
  }
  func.func @transform_4(%arg0: i32, %arg1: i32) -> (i32, i32, i32, i32) {
    %c0_i32 = arith.constant 0 : i32
    %c0_i32_0 = arith.constant 0 : i32
    %c0_i32_1 = arith.constant 0 : i32
    %c0_i32_2 = arith.constant 0 : i32
    return %arg0, %c0_i32, %c0_i32_0, %c0_i32_1 : i32, i32, i32, i32
  }
}

</mosaic_0001>

<llo_original>
// kernel: tpu_custom_call.1
$region0: #{tpu_custom_call.1}
  #allocation0 [shape = 'u32[]', space=smem, size = 0x4, offset = 0x4, fixed_abs, tag = 'smem constant byte address 0x4 - core index']
  #allocation1 [shape = 'u32[144,128]{1,0:T(1,128)}', space=vmem, size = 0x12000, scoped, tag = 'internal scratch']
  %s0 = inlined_call_operand.hbm [shape: f32[32,128], index: 0, kind: input, shape index: {}]
  %s1 = inlined_call_operand.hbm [shape: f32[32,128], index: 1, kind: input, shape index: {}]
  %s2 = inlined_call_operand.hbm [shape: f32[64,128], index: 2, kind: input, shape index: {}]
  %s3 = inlined_call_operand.hbm [shape: f32[64,128], index: 3, kind: input, shape index: {}]
  %s4 = inlined_call_operand.hbm [shape: f32[1,3,8,128], index: 4, kind: output, shape index: {}]
  %s5 = sld [smem:[#allocation0]]
  $region46: #{tpu_custom_call.1} parent=0
    _
  %s7 = ssub.s32 1, %s5
  %s8 = scalar_select 0, %s7, %s5
  $region1: #{tpu_custom_call.1} parent=0
    #allocation2 [shape = 'u8[16384]{0}', space=vmem, size = 0x4000, scoped, tag = 'input window, operand 0, single buffered']
    #allocation3 [shape = 's32[1]{0}', space=sflag, size = 0x4, scoped, tag = 'scoped memory for tpu_custom_call.1']
    #allocation4 [shape = 's32[1]{0}', space=sflag, size = 0x4, scoped, tag = 'scoped memory for tpu_custom_call.1']
    #allocation5 [shape = 'u8[16384]{0}', space=vmem, size = 0x4000, scoped, tag = 'input window, operand 1, single buffered']
    #allocation6 [shape = 's32[1]{0}', space=sflag, size = 0x4, scoped, tag = 'scoped memory for tpu_custom_call.1']
    #allocation7 [shape = 'u8[32768]{0}', space=vmem, size = 0x8000, scoped, tag = 'input window, operand 2, single buffered']
    #allocation8 [shape = 'u8[32768]{0}', space=vmem, size = 0x8000, scoped, tag = 'input window, operand 3, single buffered']
    #allocation9 [shape = 's32[1]{0}', space=sflag, size = 0x4, scoped, tag = 'scoped memory for tpu_custom_call.1']
    #allocation10 [shape = 'u8[12288]{0}', space=vmem, size = 0x3000, scoped, tag = 'output window, operand 0, single buffered']
    %9 = vsyncpa [#allocation3], 0
    %10 = vsyncpa [#allocation6], 0
    %11 = vsyncpa [#allocation9], 0
    %12 = vsyncpa [#allocation4], 0
    // Predicated region
    $region2: #{tpu_custom_call.1} parent=1 // pred_check
      _
    $region3: #{tpu_custom_call.1} parent=1 // pred_check_branch
      %14 = sbr.rel (0) target = $region5
    $region4: #{tpu_custom_call.1} parent=1 // pred_region
      %s15 = sadd.s32 0, 0
      %p16 = scmp.lt.s32.totalorder %s15, 0
      %s17 = scalar_select %p16, %s15, 0
      %s18 = smul.u32 4, %s17
      %s20 = ssub.s32 512, 512
      %21 = vsyncadd [#allocation3], %s20
      %s22 = smul.addr %s18, 128
      %s23 = scalar_lea.hbm %s0, %s22
      %s24 = sshll.u32 [#allocation2], 4
      %s25 = int_to_ptr.vmem [resolvable:$true] %s24
      %30 = dma.hbm_to_vmem [thread:$0]  %s23, 512, %s25, [#allocation3], 128, 128, 8
    $region5: #{tpu_custom_call.1} parent=1 // pred_fallthru
      _
    // Predicated region
    $region6: #{tpu_custom_call.1} parent=1 // pred_check
      _
    $region7: #{tpu_custom_call.1} parent=1 // pred_check_branch
      %32 = sbr.rel (0) target = $region9
    $region8: #{tpu_custom_call.1} parent=1 // pred_region
      %s33 = sadd.s32 0, 0
      %p34 = scmp.lt.s32.totalorder %s33, 0
      %s35 = scalar_select %p34, %s33, 0
      %s36 = smul.u32 4, %s35
      %s38 = ssub.s32 512, 512
      %39 = vsyncadd [#allocation6], %s38
      %s40 = smul.addr %s36, 128
      %s41 = scalar_lea.hbm %s1, %s40
      %s42 = sshll.u32 [#allocation5], 4
      %s43 = int_to_ptr.vmem [resolvable:$true] %s42
      %48 = dma.hbm_to_vmem [thread:$0]  %s41, 512, %s43, [#allocation6], 128, 128, 8
    $region9: #{tpu_custom_call.1} parent=1 // pred_fallthru
      _
    // Predicated region
    $region10: #{tpu_custom_call.1} parent=1 // pred_check
      _
    $region11: #{tpu_custom_call.1} parent=1 // pred_check_branch
      %50 = sbr.rel (0) target = $region13
    $region12: #{tpu_custom_call.1} parent=1 // pred_region
      %s51 = sadd.s32 0, 0
      %p52 = scmp.lt.s32.totalorder %s51, 0
      %s53 = scalar_select %p52, %s51, 0
      %s54 = smul.u32 8, %s53
      %s56 = ssub.s32 1024, 1024
      %57 = vsyncadd [#allocation6], %s56
      %s58 = smul.addr %s54, 128
      %s59 = scalar_lea.hbm %s2, %s58
      %s60 = sshll.u32 [#allocation7], 4
      %s61 = int_to_ptr.vmem [resolvable:$true] %s60
      %66 = dma.hbm_to_vmem [thread:$0]  %s59, 1024, %s61, [#allocation6], 128, 128, 8
    $region13: #{tpu_custom_call.1} parent=1 // pred_fallthru
      _
    // Predicated region
    $region14: #{tpu_custom_call.1} parent=1 // pred_check
      _
    $region15: #{tpu_custom_call.1} parent=1 // pred_check_branch
      %68 = sbr.rel (0) target = $region17
    $region16: #{tpu_custom_call.1} parent=1 // pred_region
      %s69 = sadd.s32 0, 0
      %p70 = scmp.lt.s32.totalorder %s69, 0
      %s71 = scalar_select %p70, %s69, 0
      %s72 = smul.u32 8, %s71
      %s74 = ssub.s32 1024, 1024
      %75 = vsyncadd [#allocation9], %s74
      %s76 = smul.addr %s72, 128
      %s77 = scalar_lea.hbm %s3, %s76
      %s78 = sshll.u32 [#allocation8], 4
      %s79 = int_to_ptr.vmem [resolvable:$true] %s78
      %84 = dma.hbm_to_vmem [thread:$0]  %s77, 1024, %s79, [#allocation9], 128, 128, 8
    $region17: #{tpu_custom_call.1} parent=1 // pred_fallthru
      _
    // Predicated region
    $region18: #{tpu_custom_call.1} parent=1 // pred_check
      _
    $region19: #{tpu_custom_call.1} parent=1 // pred_check_branch
      %86 = sbr.rel (0) target = $region21
    $region20: #{tpu_custom_call.1} parent=1 // pred_region
      %87 = dma.done [#allocation3], 512
    $region21: #{tpu_custom_call.1} parent=1 // pred_fallthru
      _
    // Predicated region
    $region22: #{tpu_custom_call.1} parent=1 // pred_check
      _
    $region23: #{tpu_custom_call.1} parent=1 // pred_check_branch
      %89 = sbr.rel (0) target = $region25
    $region24: #{tpu_custom_call.1} parent=1 // pred_region
      %90 = dma.done [#allocation6], 512
    $region25: #{tpu_custom_call.1} parent=1 // pred_fallthru
      _
    // Predicated region
    $region26: #{tpu_custom_call.1} parent=1 // pred_check
      _
    $region27: #{tpu_custom_call.1} parent=1 // pred_check_branch
      %92 = sbr.rel (0) target = $region29
    $region28: #{tpu_custom_call.1} parent=1 // pred_region
      %93 = dma.done [#allocation6], 1024
    $region29: #{tpu_custom_call.1} parent=1 // pred_fallthru
      _
    // Predicated region
    $region30: #{tpu_custom_call.1} parent=1 // pred_check
      _
    $region31: #{tpu_custom_call.1} parent=1 // pred_check_branch
      %95 = sbr.rel (0) target = $region33
    $region32: #{tpu_custom_call.1} parent=1 // pred_region
      %96 = dma.done [#allocation9], 1024
    $region33: #{tpu_custom_call.1} parent=1 // pred_fallthru
      _
    %s97 = sadd.s32 0, 0
    %p98 = scmp.lt.s32.totalorder %s97, 0
    %s99 = scalar_select %p98, %s97, 0
    %s100 = smul.u32 4, %s99
    %s101 = sadd.s32 0, 0
    %p102 = scmp.lt.s32.totalorder %s101, 0
    %s103 = scalar_select %p102, %s101, 0
    %s104 = smul.u32 4, %s103
    %s105 = sadd.s32 0, 0
    %p106 = scmp.lt.s32.totalorder %s105, 0
    %s107 = scalar_select %p106, %s105, 0
    %s108 = smul.u32 8, %s107
    %s109 = sadd.s32 0, 0
    %p110 = scmp.lt.s32.totalorder %s109, 0
    %s111 = scalar_select %p110, %s109, 0
    %s112 = smul.u32 8, %s111
    %p113 = scmp.eq.s32.totalorder 0, 0
    // Predicated region
    $region34: #{tpu_custom_call.1} parent=1 // pred_check
      %p114 = pneg %p113
    $region35: #{tpu_custom_call.1} parent=1 // pred_check_branch
      %116 = sbr.rel (%p114) target = $region37
    $region36: #{tpu_custom_call.1} parent=1 // pred_region
      %117 = vst [vmem:[#allocation10] sm:$0xff] 0.0
      %118 = vst [vmem:[#allocation10 + $0x8] sm:$0xff] 0.0
      %119 = vst [vmem:[#allocation10 + $0x10] sm:$0xff] 0.0
    $region37: #{tpu_custom_call.1} parent=1 // pred_fallthru
      _
    %v120 = vld [vmem:[#allocation2] sm:$0xff]
    %v121 = vld [vmem:[#allocation2 + $0x8] sm:$0xff]
    %v122 = vld [vmem:[#allocation2 + $0x10] sm:$0xff]
    %v123 = vld [vmem:[#allocation2 + $0x18] sm:$0xff]
    %v124 = vld [vmem:[#allocation5] sm:$0xff]
    %v125 = vld [vmem:[#allocation5 + $0x8] sm:$0xff]
    %v126 = vld [vmem:[#allocation5 + $0x10] sm:$0xff]
    %v127 = vld [vmem:[#allocation5 + $0x18] sm:$0xff]
    %v128 = vlog2.pop %v120
    %v129 = vmul.f32 %v128, 0.6931472
    %v130 = vlog2.pop %v121
    %v131 = vmul.f32 %v130, 0.6931472
    %v132 = vlog2.pop %v122
    %v133 = vmul.f32 %v132, 0.6931472
    %v134 = vlog2.pop %v123
    %v135 = vmul.f32 %v134, 0.6931472
    %v136 = vmax.f32 %v129, -100.0
    %v137 = vmax.f32 %v131, -100.0
    %v138 = vmax.f32 %v133, -100.0
    %v139 = vmax.f32 %v135, -100.0
    %v140 = vsub.f32 1.0, %v120
    %v141 = vsub.f32 1.0, %v121
    %v142 = vsub.f32 1.0, %v122
    %v143 = vsub.f32 1.0, %v123
    %v144 = vlog2.pop %v140
    %v145 = vmul.f32 %v144, 0.6931472
    %v146 = vlog2.pop %v141
    %v147 = vmul.f32 %v146, 0.6931472
    %v148 = vlog2.pop %v142
    %v149 = vmul.f32 %v148, 0.6931472
    %v150 = vlog2.pop %v143
    %v151 = vmul.f32 %v150, 0.6931472
    %v152 = vmax.f32 %v145, -100.0
    %v153 = vmax.f32 %v147, -100.0
    %v154 = vmax.f32 %v149, -100.0
    %v155 = vmax.f32 %v151, -100.0
    %v156 = vmul.f32 %v124, %v136
    %v157 = vmul.f32 %v125, %v137
    %v158 = vmul.f32 %v126, %v138
    %v159 = vmul.f32 %v127, %v139
    %v160 = vsub.f32 1.0, %v124
    %v161 = vsub.f32 1.0, %v125
    %v162 = vsub.f32 1.0, %v126
    %v163 = vsub.f32 1.0, %v127
    %v164 = vmul.f32 %v160, %v152
    %v165 = vmul.f32 %v161, %v153
    %v166 = vmul.f32 %v162, %v154
    %v167 = vmul.f32 %v163, %v155
    %v168 = vadd.f32 %v156, %v164
    %v169 = vadd.f32 %v157, %v165
    %v170 = vadd.f32 %v158, %v166
    %v171 = vadd.f32 %v159, %v167
    %v172 = vsub.f32 0.0, %v168
    %v173 = vsub.f32 0.0, %v169
    %v174 = vsub.f32 0.0, %v170
    %v175 = vsub.f32 0.0, %v171
    %v176 = vld [vmem:[#allocation7] sm:$0xff]
    %v177 = vld [vmem:[#allocation7 + $0x8] sm:$0xff]
    %v178 = vld [vmem:[#allocation7 + $0x10] sm:$0xff]
    %v179 = vld [vmem:[#allocation7 + $0x18] sm:$0xff]
    %v180 = vld [vmem:[#allocation7 + $0x20] sm:$0xff]
    %v181 = vld [vmem:[#allocation7 + $0x28] sm:$0xff]
    %v182 = vld [vmem:[#allocation7 + $0x30] sm:$0xff]
    %v183 = vld [vmem:[#allocation7 + $0x38] sm:$0xff]
    %v184 = vld [vmem:[#allocation8] sm:$0xff]
    %v185 = vld [vmem:[#allocation8 + $0x8] sm:$0xff]
    %v186 = vld [vmem:[#allocation8 + $0x10] sm:$0xff]
    %v187 = vld [vmem:[#allocation8 + $0x18] sm:$0xff]
    %v188 = vld [vmem:[#allocation8 + $0x20] sm:$0xff]
    %v189 = vld [vmem:[#allocation8 + $0x28] sm:$0xff]
    %v190 = vld [vmem:[#allocation8 + $0x30] sm:$0xff]
    %v191 = vld [vmem:[#allocation8 + $0x38] sm:$0xff]
    %v192 = vsub.f32 %v176, %v184
    %v193 = vsub.f32 %v177, %v185
    %v194 = vsub.f32 %v178, %v186
    %v195 = vsub.f32 %v179, %v187
    %v196 = vsub.f32 %v180, %v188
    %v197 = vsub.f32 %v181, %v189
    %v198 = vsub.f32 %v182, %v190
    %v199 = vsub.f32 %v183, %v191
    %v200 = vand.u32 2147483647, %v192
    %v201 = vand.u32 2147483647, %v193
    %v202 = vand.u32 2147483647, %v194
    %v203 = vand.u32 2147483647, %v195
    %v204 = vand.u32 2147483647, %v196
    %v205 = vand.u32 2147483647, %v197
    %v206 = vand.u32 2147483647, %v198
    %v207 = vand.u32 2147483647, %v199
    %vm208 = vcmp.lt.f32.partialorder %v200, 0.11111111
    %vm209 = vcmp.lt.f32.partialorder %v201, 0.11111111
    %vm210 = vcmp.lt.f32.partialorder %v202, 0.11111111
    %vm211 = vcmp.lt.f32.partialorder %v203, 0.11111111
    %vm212 = vcmp.lt.f32.partialorder %v204, 0.11111111
    %vm213 = vcmp.lt.f32.partialorder %v205, 0.11111111
    %vm214 = vcmp.lt.f32.partialorder %v206, 0.11111111
    %vm215 = vcmp.lt.f32.partialorder %v207, 0.11111111
    %v216 = vmul.f32 %v200, %v200
    %v217 = vmul.f32 %v201, %v201
    %v218 = vmul.f32 %v202, %v202
    %v219 = vmul.f32 %v203, %v203
    %v220 = vmul.f32 %v204, %v204
    %v221 = vmul.f32 %v205, %v205
    %v222 = vmul.f32 %v206, %v206
    %v223 = vmul.f32 %v207, %v207
    %v224 = vmul.f32 %v216, 4.5
    %v225 = vmul.f32 %v217, 4.5
    %v226 = vmul.f32 %v218, 4.5
    %v227 = vmul.f32 %v219, 4.5
    %v228 = vmul.f32 %v220, 4.5
    %v229 = vmul.f32 %v221, 4.5
    %v230 = vmul.f32 %v222, 4.5
    %v231 = vmul.f32 %v223, 4.5
    %v232 = vsub.f32 %v200, 0.055555556
    %v233 = vsub.f32 %v201, 0.055555556
    %v234 = vsub.f32 %v202, 0.055555556
    %v235 = vsub.f32 %v203, 0.055555556
    %v236 = vsub.f32 %v204, 0.055555556
    %v237 = vsub.f32 %v205, 0.055555556
    %v238 = vsub.f32 %v206, 0.055555556
    %v239 = vsub.f32 %v207, 0.055555556
    %v240 = vsel %vm208, %v224, %v232
    %v241 = vsel %vm209, %v225, %v233
    %v242 = vsel %vm210, %v226, %v234
    %v243 = vsel %vm211, %v227, %v235
    %v244 = vsel %vm212, %v228, %v236
    %v245 = vsel %vm213, %v229, %v237
    %v246 = vsel %vm214, %v230, %v238
    %v247 = vsel %vm215, %v231, %v239
    %v248 = vld [vmem:[#allocation10] sm:$0xff]
    %v249 = vadd.f32 %v172, %v173
    %v250 = vadd.f32 %v249, %v174
    %v251 = vadd.f32 %v250, %v175
    %v252 = vadd.f32 %v248, %v251
    %253 = vst [vmem:[#allocation10] sm:$0xff] %v252
    %s254 = scalar_lea.vmem [#allocation10], 8
    %v255 = vld [vmem:[%s254] sm:$0xff]
    %v256 = vadd.f32 %v240, %v241
    %v257 = vadd.f32 %v256, %v242
    %v258 = vadd.f32 %v257, %v243
    %v259 = vadd.f32 %v258, %v244
    %v260 = vadd.f32 %v259, %v245
    %v261 = vadd.f32 %v260, %v246
    %v262 = vadd.f32 %v261, %v247
    %v263 = vadd.f32 %v255, %v262
    %264 = vst [vmem:[%s254] sm:$0xff] %v263
    %s265 = scalar_lea.vmem [#allocation10], 16
    %v266 = vld [vmem:[%s265] sm:$0xff]
    %v267 = vadd.f32 %v124, %v125
    %v268 = vadd.f32 %v267, %v126
    %v269 = vadd.f32 %v268, %v127
    %v270 = vadd.f32 %v266, %v269
    %271 = vst [vmem:[%s265] sm:$0xff] %v270
    // Predicated region
    $region38: #{tpu_custom_call.1} parent=1 // pred_check
      _
    $region39: #{tpu_custom_call.1} parent=1 // pred_check_branch
      %273 = sbr.rel (0) target = $region41
    $region40: #{tpu_custom_call.1} parent=1 // pred_region
      %s275 = ssub.s32 384, 384
      %276 = vsyncadd [#allocation4], %s275
      %s277 = sshll.u32 [#allocation10], 4
      %s278 = int_to_ptr.vmem [resolvable:$true] %s277
      %283 = dma.vmem_to_hbm [thread:$0]  %s278, 384, %s4, [#allocation4], 128, 128, 8
    $region41: #{tpu_custom_call.1} parent=1 // pred_fallthru
      _
    // Predicated region
    $region42: #{tpu_custom_call.1} parent=1 // pred_check
      _
    $region43: #{tpu_custom_call.1} parent=1 // pred_check_branch
      %285 = sbr.rel (0) target = $region45
    $region44: #{tpu_custom_call.1} parent=1 // pred_region
      %286 = dma.done [#allocation4], 384
    $region45: #{tpu_custom_call.1} parent=1 // pred_fallthru
      _
    %287 = vsyncpa [#allocation3], 1
    %288 = vsyncpa [#allocation6], 1
    %289 = vsyncpa [#allocation9], 1
    %290 = vsyncpa [#allocation4], 1

</llo_original>
